<compile_context>
chip_gen: v7x
topology: tpu7x:2x2x1
jax: 0.10.0
libtpu: 0.0.40
codegen_flags: <defaults>
</compile_context>

<pallas_src>
import jax
import jax.numpy as jnp
import numpy as np
from jax.experimental import pallas as pl
from jax.experimental.pallas import tpu as pltpu


# ---------------------------------------------------------------------------
# Kernel 1: step-invariant feature projection (once per sequence)
#   f_proj = feats2d @ W1f^T + (b1f + b1h)          [B*S, M]
# ---------------------------------------------------------------------------
def feat_proj_kernel(feats2d_ref, w1f_t_ref, b12_ref, out_ref):
    out_ref[...] = (
        jnp.dot(feats2d_ref[...], w1f_t_ref[...],
                preferred_element_type=jnp.float32)
        + b12_ref[...]
    )


# ---------------------------------------------------------------------------
# Kernel 2: one decode step — attention + LSTM cell (fused)
# ---------------------------------------------------------------------------
def decoder_step_kernel(emb_ref, h0_ref, c0_ref, feats_ref, fproj_ref,
                        w1h_t_ref, w2_ref, wx_ref, b_ref,
                        h_out_ref, c_out_ref, wgt_out_ref):
    emb   = emb_ref[...]            # [B, H]     embedded word
    h0    = h0_ref[...]             # [B, H]     previous hidden
    c0    = c0_ref[...]             # [B, H]     previous cell
    feats = feats_ref[...]          # [B, S, H]  encoder outputs
    fproj = fproj_ref[...]          # [B, S, M]  precomputed W1f·feats + (b1f+b1h)

    H = h0.shape[1]

    # ---- temporal attention (fusion='addition', activation=tanh) ----------
    # weight pre-transposed -> no in-kernel .T; bias already folded into fproj.
    h_proj = jnp.dot(h0, w1h_t_ref[...],
                     preferred_element_type=jnp.float32)                 # [B, M]
    act = jnp.tanh(h_proj[:, None, :] + fproj)                           # [B, S, M] (EUP)

    # linear2_temporal (M -> 1, no bias): keep w2 2-D ([1, M]) and lane-reduce (XLU).
    scores = jnp.sum(act * w2_ref[...], axis=-1)                         # [B, S]

    # numerically-stable softmax over the sequence dim
    m = jnp.max(scores, axis=-1, keepdims=True)
    e = jnp.exp(scores - m)
    denom = jnp.sum(e, axis=-1, keepdims=True)
    weight = e / denom                                                   # [B, S]

    # context = bmm(weight.unsqueeze(1), feats).squeeze(1)
    ctx = jnp.sum(weight[:, :, None] * feats, axis=1)                    # [B, H]

    # ---- LSTMCell: single fused gate matmul --------------------------------
    # x = cat([emb, ctx, h0]);  wx = [W_ih | W_hh]^T pre-fused to [3H, 4H];
    # b = b_ih + b_hh pre-fused to [1, 4H].  One MXU push with K = 3H.
    x = jnp.concatenate([emb, ctx, h0], axis=1)                          # [B, 3H]
    gates = (jnp.dot(x, wx_ref[...], preferred_element_type=jnp.float32)
             + b_ref[...])                                               # [B, 4H]

    i_g = jax.nn.sigmoid(gates[:, 0:H])
    f_g = jax.nn.sigmoid(gates[:, H:2 * H])
    g_g = jnp.tanh(gates[:, 2 * H:3 * H])
    o_g = jax.nn.sigmoid(gates[:, 3 * H:4 * H])

    c_new = f_g * c0 + i_g * g_g
    h_new = o_g * jnp.tanh(c_new)

    h_out_ref[...]   = h_new
    c_out_ref[...]   = c_new
    wgt_out_ref[...] = weight


# ---------------------------------------------------------------------------
# Wrappers
# ---------------------------------------------------------------------------
_VMEM = pl.BlockSpec(memory_space=pltpu.MemorySpace.VMEM)


def prepare_decoder_params(params):
    """One-time layout plumbing: pre-transpose + fuse weights/biases."""
    H = params['w_hh'].shape[1]
    M = params['w1h'].shape[0]
    return {
        'embedding': params['embedding'],
        'w1h_t': params['w1h'].T,                                        # [H, M]
        'w1f_t': params['w1f'].T,                                        # [H, M]
        'b12':   (params['b1h'] + params['b1f']).reshape(1, M),          # [1, M]
        'w2':    params['w2'],                                           # [1, M]
        # fused gate weight: rows 0:H word, H:2H context, 2H:3H hidden
        'wx':    jnp.concatenate([params['w_ih'].T, params['w_hh'].T], axis=0),  # [3H, 4H]
        'b_gates': (params['b_ih'] + params['b_hh']).reshape(1, 4 * H),  # [1, 4H]
    }


def precompute_feat_proj(encoder_outputs, prepped):
    """Step-invariant: run once per sequence, reuse for every decode step."""
    B, S, H = encoder_outputs.shape
    M = prepped['w1f_t'].shape[1]
    feats2d = encoder_outputs.reshape(B * S, H)      # single well-filled 2-D matmul
    fproj = pl.pallas_call(
        feat_proj_kernel,
        out_shape=jax.ShapeDtypeStruct((B * S, M), jnp.float32),
        in_specs=[_VMEM, _VMEM, _VMEM],
        out_specs=_VMEM,
    )(feats2d, prepped['w1f_t'], prepped['b12'])
    return fproj.reshape(B, S, M)


def lstm_decoder_step(it, encoder_outputs, f_proj, decoder_hidden, prepped):
    h0, c0 = decoder_hidden
    B, S, H = encoder_outputs.shape

    # embedding row gather kept as XLA glue (tiny; see TODO at top for in-kernel gather)
    emb = prepped['embedding'][it]                   # [B, H]

    h_new, c_new, frames_weight = pl.pallas_call(
        decoder_step_kernel,
        out_shape=(jax.ShapeDtypeStruct((B, H), jnp.float32),
                   jax.ShapeDtypeStruct((B, H), jnp.float32),
                   jax.ShapeDtypeStruct((B, S), jnp.float32)),
        in_specs=[_VMEM] * 9,
        out_specs=(_VMEM, _VMEM, _VMEM),
    )(emb, h0, c0, encoder_outputs, f_proj,
      prepped['w1h_t'], prepped['w2'], prepped['wx'], prepped['b_gates'])

    # dropout is identity in eval mode
    return h_new, (h_new, c_new), frames_weight


def lstm_decoder_forward(it, encoder_outputs, decoder_hidden, params,
                         prepped=None, f_proj=None):
    """Matches LSTM_Decoder.forward(it, encoder_outputs, category=None, decoder_hidden)."""
    if prepped is None:
        prepped = prepare_decoder_params(params)
    if f_proj is None:
        f_proj = precompute_feat_proj(encoder_outputs, prepped)
    return lstm_decoder_step(it, encoder_outputs, f_proj, decoder_hidden, prepped)


# ---------------------------------------------------------------------------
# Pure-JAX reference (mirrors the PyTorch forward, unfused weights)
# ---------------------------------------------------------------------------
def ref_forward(it, feats, decoder_hidden, p):
    h0, c0 = decoder_hidden
    B, S, H = feats.shape
    emb = p['embedding'][it]

    h_proj = h0 @ p['w1h'].T + p['b1h']                             # [B, M]
    f_proj = jnp.einsum('bsh,mh->bsm', feats, p['w1f']) + p['b1f']  # [B, S, M]
    act = jnp.tanh(h_proj[:, None, :] + f_proj)
    scores = jnp.einsum('bsm,om->bs', act, p['w2'])
    weight = jax.nn.softmax(scores, axis=1)
    ctx = jnp.einsum('bs,bsh->bh', weight, feats)

    x = jnp.concatenate([emb, ctx], axis=1)
    gates = x @ p['w_ih'].T + p['b_ih'] + h0 @ p['w_hh'].T + p['b_hh']
    i_g = jax.nn.sigmoid(gates[:, 0:H])
    f_g = jax.nn.sigmoid(gates[:, H:2 * H])
    g_g = jnp.tanh(gates[:, 2 * H:3 * H])
    o_g = jax.nn.sigmoid(gates[:, 3 * H:4 * H])
    c_new = f_g * c0 + i_g * g_g
    h_new = o_g * jnp.tanh(c_new)
    return h_new, (h_new, c_new), weight


# ---------------------------------------------------------------------------
if __name__ == "__main__":
    # dim_hidden = att_mid_size = 128 (lane-aligned), seq=8, batch=4
    B, S, H, M, VOCAB = 4, 8, 128, 128, 50
    FORGET_BIAS = 0.6

    key = jax.random.PRNGKey(0)
    ks = jax.random.split(key, 12)

    def rn(k, shape, scale):
        return (scale * jax.random.normal(k, shape)).astype(jnp.float32)

    # deterministic synthetic parameters (shapes match the PyTorch module)
    params = {
        'embedding': rn(ks[0], (VOCAB, H), 0.1),
        # Attentional_Attention
        'w1h': rn(ks[1], (M, H), 0.1), 'b1h': rn(ks[2], (M,), 0.1),
        'w1f': rn(ks[3], (M, H), 0.1), 'b1f': rn(ks[4], (M,), 0.1),
        'w2':  rn(ks[5], (1, M), 0.1),
        # LSTMCell (input = word_size + feats_size = 2H)
        'w_ih': rn(ks[6], (4 * H, 2 * H), 0.1),
        'w_hh': rn(ks[7], (4 * H, H), 0.1),
        'b_ih': rn(ks[8], (4 * H,), 0.1),
        'b_hh': rn(ks[9], (4 * H,), 0.1),
    }
    # _init_lstm_forget_bias: forget-gate chunk of both biases += forget_bias / 2
    params['b_ih'] = params['b_ih'].at[H:2 * H].add(FORGET_BIAS / 2)
    params['b_hh'] = params['b_hh'].at[H:2 * H].add(FORGET_BIAS / 2)

    # inputs
    it = jax.random.randint(ks[10], (B,), 0, VOCAB, dtype=jnp.int32)     # word ids
    encoder_outputs = rn(ks[11], (B, S, H), 1.0)                         # [B, S, H]
    h0 = rn(jax.random.PRNGKey(123), (B, H), 0.5)
    c0 = rn(jax.random.PRNGKey(456), (B, H), 0.5)

    # once-per-sequence preparation (hoisted out of the per-step path)
    prepped = prepare_decoder_params(params)
    f_proj = precompute_feat_proj(encoder_outputs, prepped)

    out_h, (h_new, c_new), frames_weight = lstm_decoder_forward(
        it, encoder_outputs, (h0, c0), params, prepped=prepped, f_proj=f_proj)
    jax.block_until_ready((out_h, h_new, c_new, frames_weight))

    # correctness check vs pure-JAX reference
    r_h, (r_hn, r_cn), r_w = ref_forward(it, encoder_outputs, (h0, c0), params)
    np.testing.assert_allclose(np.asarray(out_h), np.asarray(r_h), rtol=1e-4, atol=1e-4)
    np.testing.assert_allclose(np.asarray(c_new), np.asarray(r_cn), rtol=1e-4, atol=1e-4)
    np.testing.assert_allclose(np.asarray(frames_weight), np.asarray(r_w), rtol=1e-4, atol=1e-4)

    print("KERNEL_OK")
</pallas_src>

<mosaic_0001>
module attributes {stable_mosaic.version = 11 : i64} {
  func.func @feat_proj_kernel(%arg0: memref<32x128xf32, #tpu.memory_space<vmem>>, %arg1: memref<128x128xf32, #tpu.memory_space<vmem>>, %arg2: memref<1x128xf32, #tpu.memory_space<vmem>>, %arg3: memref<32x128xf32, #tpu.memory_space<vmem>>) attributes {dimension_semantics = [], scalar_prefetch = 0 : i64, scratch_operands = 0 : i64, tpu.core_type = #tpu.core_type<tc>} {
    %c0 = arith.constant 0 : index
    %c0_0 = arith.constant 0 : index
    %0 = vector.load %arg0[%c0, %c0_0] : memref<32x128xf32, #tpu.memory_space<vmem>>, vector<32x128xf32>
    %c0_1 = arith.constant 0 : index
    %c0_2 = arith.constant 0 : index
    %1 = vector.load %arg1[%c0_1, %c0_2] : memref<128x128xf32, #tpu.memory_space<vmem>>, vector<128x128xf32>
    %cst = arith.constant dense<0.000000e+00> : vector<32x128xf32>
    %2 = tpu.matmul %0, %1, %cst {dimension_numbers = #tpu.dot_dimension_numbers<[1], [0], [0], [1], [0, 0, 1, 1], [], []>} : vector<32x128xf32>, vector<128x128xf32>, vector<32x128xf32> -> vector<32x128xf32>
    %c0_3 = arith.constant 0 : index
    %c0_4 = arith.constant 0 : index
    %3 = vector.load %arg2[%c0_3, %c0_4] : memref<1x128xf32, #tpu.memory_space<vmem>>, vector<1x128xf32>
    %4 = vector.broadcast %3 : vector<1x128xf32> to vector<32x128xf32>
    %5 = arith.addf %2, %4 : vector<32x128xf32>
    %c0_5 = arith.constant 0 : index
    %c0_6 = arith.constant 0 : index
    %6 = vector.load %arg3[%c0_5, %c0_6] : memref<32x128xf32, #tpu.memory_space<vmem>>, vector<32x128xf32>
    tpu.vector_store %arg3[%c0_5, %c0_6], %5 {strides = array<i32>} : memref<32x128xf32, #tpu.memory_space<vmem>>, vector<32x128xf32>,
    return
  }
}

</mosaic_0001>

<llo_original>
// kernel: tpu_custom_call.1
$region0: #{tpu_custom_call.1}
  #allocation0 [shape = 'u32[]', space=smem, size = 0x4, offset = 0x4, fixed_abs, tag = 'smem constant byte address 0x4 - core index']
  #allocation1 [shape = 'u32[144,128]{1,0:T(1,128)}', space=vmem, size = 0x12000, scoped, tag = 'internal scratch']
  %s0 = inlined_call_operand.hbm [shape: f32[32,128], index: 0, kind: input, shape index: {}]
  %s1 = inlined_call_operand.hbm [shape: f32[128,128], index: 1, kind: input, shape index: {}]
  %s2 = inlined_call_operand.vmem [shape: f32[1,128], index: 2, kind: input, shape index: {}]
  %s3 = inlined_call_operand.hbm [shape: f32[32,128], index: 3, kind: output, shape index: {}]
  %s4 = sld [smem:[#allocation0]]
  $region30: #{tpu_custom_call.1} parent=0
    _
  %s6 = ssub.s32 1, %s4
  %s7 = scalar_select 0, %s6, %s4
  $region1: #{tpu_custom_call.1} parent=0
    #allocation2 [shape = 'u8[16384]{0}', space=vmem, size = 0x4000, scoped, tag = 'input window, operand 0, single buffered']
    #allocation3 [shape = 's32[1]{0}', space=sflag, size = 0x4, scoped, tag = 'scoped memory for tpu_custom_call.1']
    #allocation4 [shape = 's32[1]{0}', space=sflag, size = 0x4, scoped, tag = 'scoped memory for tpu_custom_call.1']
    #allocation5 [shape = 'u8[65536]{0}', space=vmem, size = 0x10000, scoped, tag = 'input window, operand 1, single buffered']
    #allocation6 [shape = 's32[1]{0}', space=sflag, size = 0x4, scoped, tag = 'scoped memory for tpu_custom_call.1']
    #allocation7 [shape = 'u8[16384]{0}', space=vmem, size = 0x4000, scoped, tag = 'output window, operand 0, single buffered']
    %8 = vsyncpa [#allocation3], 0
    %9 = vsyncpa [#allocation6], 0
    %10 = vsyncpa [#allocation4], 0
    // Predicated region
    $region2: #{tpu_custom_call.1} parent=1 // pred_check
      _
    $region3: #{tpu_custom_call.1} parent=1 // pred_check_branch
      %12 = sbr.rel (0) target = $region5
    $region4: #{tpu_custom_call.1} parent=1 // pred_region
      %s14 = ssub.s32 512, 512
      %15 = vsyncadd [#allocation3], %s14
      %s16 = sshll.u32 [#allocation2], 4
      %s17 = int_to_ptr.vmem [resolvable:$true] %s16
      %22 = dma.hbm_to_vmem [thread:$0]  %s0, 512, %s17, [#allocation3], 128, 128, 8
    $region5: #{tpu_custom_call.1} parent=1 // pred_fallthru
      _
    // Predicated region
    $region6: #{tpu_custom_call.1} parent=1 // pred_check
      _
    $region7: #{tpu_custom_call.1} parent=1 // pred_check_branch
      %24 = sbr.rel (0) target = $region9
    $region8: #{tpu_custom_call.1} parent=1 // pred_region
      %s26 = ssub.s32 2048, 2048
      %27 = vsyncadd [#allocation6], %s26
      %s28 = sshll.u32 [#allocation5], 4
      %s29 = int_to_ptr.vmem [resolvable:$true] %s28
      %34 = dma.hbm_to_vmem [thread:$0]  %s1, 2048, %s29, [#allocation6], 128, 128, 8
    $region9: #{tpu_custom_call.1} parent=1 // pred_fallthru
      _
    // Predicated region
    $region10: #{tpu_custom_call.1} parent=1 // pred_check
      _
    $region11: #{tpu_custom_call.1} parent=1 // pred_check_branch
      %36 = sbr.rel (0) target = $region13
    $region12: #{tpu_custom_call.1} parent=1 // pred_region
      _
    $region13: #{tpu_custom_call.1} parent=1 // pred_fallthru
      _
    // Predicated region
    $region14: #{tpu_custom_call.1} parent=1 // pred_check
      _
    $region15: #{tpu_custom_call.1} parent=1 // pred_check_branch
      %38 = sbr.rel (0) target = $region17
    $region16: #{tpu_custom_call.1} parent=1 // pred_region
      %39 = dma.done [#allocation3], 512
    $region17: #{tpu_custom_call.1} parent=1 // pred_fallthru
      _
    // Predicated region
    $region18: #{tpu_custom_call.1} parent=1 // pred_check
      _
    $region19: #{tpu_custom_call.1} parent=1 // pred_check_branch
      %41 = sbr.rel (0) target = $region21
    $region20: #{tpu_custom_call.1} parent=1 // pred_region
      %42 = dma.done [#allocation6], 2048
    $region21: #{tpu_custom_call.1} parent=1 // pred_fallthru
      _
    %v43 = vld [vmem:[#allocation2] sm:$0xff]
    %v44 = vld [vmem:[#allocation2 + $0x8] sm:$0xff]
    %v45 = vld [vmem:[#allocation2 + $0x10] sm:$0xff]
    %v46 = vld [vmem:[#allocation2 + $0x18] sm:$0xff]
    %v47 = vld [vmem:[#allocation5] sm:$0xff]
    %v48 = vld [vmem:[#allocation5 + $0x8] sm:$0xff]
    %v49 = vld [vmem:[#allocation5 + $0x10] sm:$0xff]
    %v50 = vld [vmem:[#allocation5 + $0x18] sm:$0xff]
    %v51 = vld [vmem:[#allocation5 + $0x20] sm:$0xff]
    %v52 = vld [vmem:[#allocation5 + $0x28] sm:$0xff]
    %v53 = vld [vmem:[#allocation5 + $0x30] sm:$0xff]
    %v54 = vld [vmem:[#allocation5 + $0x38] sm:$0xff]
    %v55 = vld [vmem:[#allocation5 + $0x40] sm:$0xff]
    %v56 = vld [vmem:[#allocation5 + $0x48] sm:$0xff]
    %v57 = vld [vmem:[#allocation5 + $0x50] sm:$0xff]
    %v58 = vld [vmem:[#allocation5 + $0x58] sm:$0xff]
    %v59 = vld [vmem:[#allocation5 + $0x60] sm:$0xff]
    %v60 = vld [vmem:[#allocation5 + $0x68] sm:$0xff]
    %v61 = vld [vmem:[#allocation5 + $0x70] sm:$0xff]
    %v62 = vld [vmem:[#allocation5 + $0x78] sm:$0xff]
    %v63 = vld [vmem:[%s2] sm:$0x1]
    %v65 = vlaneseq
    %v66 = vshrl.u32 %v65, 7
    %v67 = vsub.s32 0, %v66
    %v68 = vrot.slane %v63, %v67
    %70 = vmatprep.subr.mxu0 0.0
    %71 = vmatpush1.msra.mxu0 %v47
    %72 = vmatprep.subr.mxu0 0.0
    %73 = vmatpush1.msra.mxu0 %v48
    %74 = vmatprep.subr.mxu0 0.0
    %75 = vmatpush1.msra.mxu0 %v49
    %76 = vmatprep.subr.mxu0 0.0
    %77 = vmatpush1.msra.mxu0 %v50
    %78 = vmatprep.subr.mxu0 0.0
    %79 = vmatpush1.msra.mxu0 %v51
    %80 = vmatprep.subr.mxu0 0.0
    %81 = vmatpush1.msra.mxu0 %v52
    %82 = vmatprep.subr.mxu0 0.0
    %83 = vmatpush1.msra.mxu0 %v53
    %84 = vmatprep.subr.mxu0 0.0
    %85 = vmatpush1.msra.mxu0 %v54
    %86 = vmatprep.subr.mxu0 0.0
    %87 = vmatpush1.msra.mxu0 %v55
    %88 = vmatprep.subr.mxu0 0.0
    %89 = vmatpush1.msra.mxu0 %v56
    %90 = vmatprep.subr.mxu0 0.0
    %91 = vmatpush1.msra.mxu0 %v57
    %92 = vmatprep.subr.mxu0 0.0
    %93 = vmatpush1.msra.mxu0 %v58
    %94 = vmatprep.subr.mxu0 0.0
    %95 = vmatpush1.msra.mxu0 %v59
    %96 = vmatprep.subr.mxu0 0.0
    %97 = vmatpush1.msra.mxu0 %v60
    %98 = vmatprep.subr.mxu0 0.0
    %99 = vmatpush1.msra.mxu0 %v61
    %100 = vmatprep.subr.mxu0 0.0
    %101 = vmatpush1.msra.mxu0 %v62
    %102 = vmatprep.subr.mxu0 0.0
    %103 = vmatpush1.msra.mxu0 0.0
    %104 = vmatprep.subr.mxu0 0.0
    %105 = vmatpush1.msra.mxu0 0.0
    %106 = vmatprep.subr.mxu0 0.0
    %107 = vmatpush1.msra.mxu0 0.0
    %108 = vmatprep.subr.mxu0 0.0
    %109 = vmatpush1.msra.mxu0 0.0
    %110 = vmatprep.subr.mxu0 0.0
    %111 = vmatpush1.msra.mxu0 0.0
    %112 = vmatprep.subr.mxu0 0.0
    %113 = vmatpush1.msra.mxu0 0.0
    %114 = vmatprep.subr.mxu0 0.0
    %115 = vmatpush1.msra.mxu0 0.0
    %116 = vmatprep.subr.mxu0 0.0
    %117 = vmatpush1.msra.mxu0 0.0
    %118 = vmatprep.subr.mxu0 0.0
    %119 = vmatpush1.msra.mxu0 0.0
    %120 = vmatprep.subr.mxu0 0.0
    %121 = vmatpush1.msra.mxu0 0.0
    %122 = vmatprep.subr.mxu0 0.0
    %123 = vmatpush1.msra.mxu0 0.0
    %124 = vmatprep.subr.mxu0 0.0
    %125 = vmatpush1.msra.mxu0 0.0
    %126 = vmatprep.subr.mxu0 0.0
    %127 = vmatpush1.msra.mxu0 0.0
    %128 = vmatprep.subr.mxu0 0.0
    %129 = vmatpush1.msra.mxu0 0.0
    %130 = vmatprep.subr.mxu0 0.0
    %131 = vmatpush1.msra.mxu0 0.0
    %132 = vmatprep.subr.mxu0 0.0
    %133 = vmatpush1.msra.mxu0 0.0
    %134 = vmatprep.mubr.f32.mxu0 0.0
    %135 = vmatmul.mubr.f32.gmra.mrb[0].mxu0 %v43
    %v136 = vpop.f32.mrb[0].mxu0
    %v137 = vadd.f32 %v68, %v136
    %v138 = vpop.f32.mrb[0].mxu0
    %139 = vmatprep.mubr.f32.mxu0 0.0
    %140 = vmatmul.mubr.f32.gmra.mrb[0].mxu0 %v44
    %v141 = vpop.f32.mrb[0].mxu0
    %v142 = vadd.f32 %v68, %v141
    %v143 = vpop.f32.mrb[0].mxu0
    %144 = vmatprep.mubr.f32.mxu0 0.0
    %145 = vmatmul.mubr.f32.gmra.mrb[0].mxu0 %v45
    %v146 = vpop.f32.mrb[0].mxu0
    %v147 = vadd.f32 %v68, %v146
    %v148 = vpop.f32.mrb[0].mxu0
    %149 = vmatprep.mubr.f32.mxu0 0.0
    %150 = vmatmul.mubr.f32.gmra.mrb[0].mxu0 %v46
    %v151 = vpop.f32.mrb[0].mxu0
    %v152 = vadd.f32 %v68, %v151
    %v153 = vpop.f32.mrb[0].mxu0
    %154 = vdwg.mxu0
    %155 = vst [vmem:[#allocation7] sm:$0xff] %v137
    %156 = vst [vmem:[#allocation7 + $0x8] sm:$0xff] %v142
    %157 = vst [vmem:[#allocation7 + $0x10] sm:$0xff] %v147
    %158 = vst [vmem:[#allocation7 + $0x18] sm:$0xff] %v152
    // Predicated region
    $region22: #{tpu_custom_call.1} parent=1 // pred_check
      _
    $region23: #{tpu_custom_call.1} parent=1 // pred_check_branch
      %160 = sbr.rel (0) target = $region25
    $region24: #{tpu_custom_call.1} parent=1 // pred_region
      %s162 = ssub.s32 512, 512
      %163 = vsyncadd [#allocation4], %s162
      %s164 = sshll.u32 [#allocation7], 4
      %s165 = int_to_ptr.vmem [resolvable:$true] %s164
      %170 = dma.vmem_to_hbm [thread:$0]  %s165, 512, %s3, [#allocation4], 128, 128, 8
    $region25: #{tpu_custom_call.1} parent=1 // pred_fallthru
      _
    // Predicated region
    $region26: #{tpu_custom_call.1} parent=1 // pred_check
      _
    $region27: #{tpu_custom_call.1} parent=1 // pred_check_branch
      %172 = sbr.rel (0) target = $region29
    $region28: #{tpu_custom_call.1} parent=1 // pred_region
      %173 = dma.done [#allocation4], 512
    $region29: #{tpu_custom_call.1} parent=1 // pred_fallthru
      _
    %174 = vsyncpa [#allocation3], 1
    %175 = vsyncpa [#allocation6], 1
    %176 = vsyncpa [#allocation4], 1

</llo_original>
